<compile_context>
chip_gen: v5e
topology: v5e:2x2
jax: 0.10.0
libtpu: 0.0.40
codegen_flags: <defaults>
</compile_context>

<pallas_src>
import functools

import jax
import jax.numpy as jnp
from jax.experimental import pallas as pl
from jax.experimental.pallas import tpu as pltpu


def _round_up(x, m):
    return ((x + m - 1) // m) * m


# ---------------------------------------------------------------------------
# VMEM budgeting (lane-padding aware, chip aware)
# ---------------------------------------------------------------------------
def _tile_bytes(shape, dtype):
    """Bytes a tile occupies in VMEM including (sublane, 128)-lane padding."""
    itemsize = jnp.dtype(dtype).itemsize
    s = list(shape)
    s[-1] = _round_up(s[-1], 128)
    if len(s) >= 2:
        s[-2] = _round_up(s[-2], 8 * (4 // itemsize))   # 8 rows f32, 16 rows bf16
    n = 1
    for d in s:
        n *= d
    return n * itemsize


def _vmem_limits():
    """(scoped-vmem limit to request, tile/temporary budget) for this chip."""
    cap = 64 << 20                      # conservative default (v7x-sized VMEM)
    try:
        info = pltpu.get_tpu_info()
        v = getattr(info, "vmem_capacity_bytes", None)
        if v:
            cap = int(v)
    except Exception:
        pass
    # 128 MiB parts (v5e/v6e) -> ask for 64 MiB scoped; 64 MiB v7x -> 32 MiB.
    limit = int(min(max(cap // 2, 16 << 20), 96 << 20))
    budget = int(limit * 0.55)          # headroom for compiler scratch / spills
    return limit, budget


def _pick_block_rows(batch, per8_bytes, fixed_bytes, budget, cap_rows=2048):
    """Largest batch tile (multiple of 8 rows) whose working set fits `budget`.
    Guarantees >= 2 grid steps whenever the batch allows it, so the
    "parallel" axis can be split across TensorCores (v7x) and the input DMA
    can pipeline against compute."""
    b8 = _round_up(batch, 8)
    avail = max(budget - fixed_bytes, per8_bytes)
    bb = max(8, min((avail // per8_bytes) * 8, cap_rows, b8))
    if b8 >= 16:
        bb = min(bb, _round_up((b8 + 1) // 2, 8))
    return int(bb)


# ---------------------------------------------------------------------------
# Kernels
# ---------------------------------------------------------------------------
def _fc_kernel(q_ref, w_ref, b_ref, y_ref):
    # FC path: y = FC_fus(q).  bf16 operands, f32 accumulation, f32 bias.
    y = jnp.dot(q_ref[...], w_ref[...], preferred_element_type=jnp.float32)
    y_ref[...] = (y + b_ref[...]).astype(y_ref.dtype)


def _att_kernel(q_ref, k_ref, wk_ref, bk_ref, wqc_ref, bq_ref,
                watt_ref, batt_ref, wfx_ref, bfus_ref,
                y_ref, w_ref, *, n_valid):
    bB, dq = q_ref.shape
    n_pad = k_ref.shape[0] // bB            # k comes in flattened as (bB*N, Dq)
    da_p = wk_ref.shape[1]
    n_out = w_ref.shape[1]

    q = q_ref[...]                                                 # (bB, Dq) bf16

    # Fused q-side matmul: one MXU pass gives [fc_q(q) | q @ wfus_q].
    q_both = jnp.dot(q, wqc_ref[...], preferred_element_type=jnp.float32)
    qa = q_both[:, :da_p] + bq_ref[...]                            # (bB, Da)
    y_q = q_both[:, da_p:]                                         # (bB, Dqo)

    # x = fc_k(k): already flat 2-D -> plain MXU matmul (bf16 in, f32 acc).
    x2 = jnp.dot(k_ref[...], wk_ref[...],
                 preferred_element_type=jnp.float32) + bk_ref[...]
    x = x2.reshape(bB, n_pad, da_p)                                # (bB, N, Da) f32

    # inputs = fc_q(q).unsqueeze(1) + x ; tanh on the VPU/EUP.
    inp = jnp.tanh(x + qa[:, None, :])                             # (bB, N, Da)

    # fc_att(tanh(inputs)) -> scores (bB, N): lane reduction against the
    # single fc_att weight row (padded Da lanes are exactly zero).
    scores = jnp.sum(inp * watt_ref[...][None, :, :], axis=-1) + batt_ref[...]

    # Widen to the lane-dense output width and mask both padded object slots
    # and the extension lanes in one pass (so the w store is an unmasked vst).
    if n_out > n_pad:
        scores = jnp.concatenate(
            [scores, jnp.full((bB, n_out - n_pad), -1e30, jnp.float32)], axis=-1)
    if n_out != n_valid:
        lane = jax.lax.broadcasted_iota(jnp.int32, scores.shape, 1)
        scores = jnp.where(lane < n_valid, scores, -1e30)

    # Softmax over the object axis (max-subtracted, f32, exact reciprocal so
    # the *returned* weights sum to 1; the divide is a (bB,1) vector -> free).
    m = jnp.max(scores, axis=-1, keepdims=True)
    e = jnp.exp(scores - m)
    inv = 1.0 / jnp.sum(e, axis=-1, keepdims=True)
    w_full = e * inv                                               # (bB, n_out)
    w_ref[...] = w_full.astype(w_ref.dtype)

    # weights.bmm(x).squeeze(1) == sum_n w[b,n] * x[b,n,:]
    # (VPU multiply + sublane reduce: N is tiny here)
    x_agg = jnp.sum(w_full[:, :n_pad, None] * x, axis=1)           # (bB, Da) f32

    # fc_fusion(cat([x_agg, q], -1)) with a split weight: no lane concat.
    y = jnp.dot(x_agg.astype(jnp.bfloat16), wfx_ref[...],
                preferred_element_type=jnp.float32)
    y_ref[...] = (y + y_q + bfus_ref[...]).astype(y_ref.dtype)


# ---------------------------------------------------------------------------
# Parameters (deterministic synthetic init, PyTorch nn.Linear shapes)
# ---------------------------------------------------------------------------
def init_params(key, qk_dim, att_dim):
    def lin(k, fin, fout):
        kw, kb = jax.random.split(k)
        w = jax.random.normal(kw, (fin, fout), jnp.float32) * 0.1   # (in, out)
        b = jax.random.normal(kb, (1, fout), jnp.float32) * 0.1     # (1, out)
        return w, b

    ks = jax.random.split(key, 5)
    return {
        "fc_fusion": lin(ks[0], qk_dim + att_dim, qk_dim),
        "fc_k":      lin(ks[1], qk_dim, att_dim),
        "fc_q":      lin(ks[2], qk_dim, att_dim),
        "fc_att":    lin(ks[3], att_dim, 1),
        "FC_fus":    lin(ks[4], qk_dim * 2, qk_dim),
    }


def prepare_params(params, qk_dim, att_dim):
    """Pad / split / cast weights into the MXU-friendly kernel layout (once)."""
    da_p = _round_up(att_dim, 128)   # padded att-feature (lane) width
    dq_p = _round_up(qk_dim, 128)    # padded output (lane) width

    def pad2(a, rows, cols, dtype=jnp.float32):
        a = jnp.pad(a, ((0, rows - a.shape[0]), (0, cols - a.shape[1])))
        return a.astype(dtype)

    wfus, bfus = params["fc_fusion"]
    wk, bk = params["fc_k"]
    wq, bq = params["fc_q"]
    watt, batt = params["fc_att"]
    wfc, bfc = params["FC_fus"]

    # fc_q weight and the q-half of fc_fusion fused into one MXU RHS;
    # both halves are 128-multiples wide so the post-matmul split is free.
    wqcat = jnp.concatenate(
        [pad2(wq, qk_dim, da_p, jnp.bfloat16),
         pad2(wfus[att_dim:], qk_dim, dq_p, jnp.bfloat16)], axis=1)

    return {
        "dims": (qk_dim, att_dim, da_p, dq_p),
        "att": dict(
            wk=pad2(wk, qk_dim, da_p, jnp.bfloat16),
            bk=pad2(bk, 1, da_p),
            wqcat=wqcat,                                 # (Dq, Da_p + Dq_p) bf16
            bq=pad2(bq, 1, da_p),
            watt=pad2(watt.T, 1, da_p),                  # (1, Da_p) f32 row
            batt=batt.reshape(1, 1).astype(jnp.float32),
            wfus_x=pad2(wfus[:att_dim], da_p, dq_p, jnp.bfloat16),
            bfus=pad2(bfus, 1, dq_p),
        ),
        "fc": dict(
            w=pad2(wfc, 2 * qk_dim, dq_p, jnp.bfloat16),
            b=pad2(bfc, 1, dq_p),
        ),
    }


# ---------------------------------------------------------------------------
# Wrapper (mirrors PostFusion.forward)
# ---------------------------------------------------------------------------
def post_fusion_forward(prep, q, k=None, type="FC"):
    qk_dim, att_dim, da_p, dq_p = prep["dims"]
    vmem_limit, budget = _vmem_limits()

    if type == "FC":
        w, b = prep["fc"]["w"], prep["fc"]["b"]
        B, din = q.shape
        per8 = 2 * (_tile_bytes((8, din), jnp.bfloat16)
                    + _tile_bytes((8, dq_p), jnp.float32))
        fixed = 2 * (_tile_bytes(w.shape, jnp.bfloat16)
                     + _tile_bytes(b.shape, jnp.float32))
        bB = _pick_block_rows(B, per8, fixed, budget)
        B_pad = _round_up(B, bB)
        q_p = jnp.pad(q, ((0, B_pad - B), (0, 0))).astype(jnp.bfloat16)

        cost = pl.CostEstimate(
            flops=int(2 * B_pad * din * dq_p),
            transcendentals=0,
            bytes_accessed=int(2 * B_pad * din + 2 * din * dq_p + 4 * B_pad * dq_p),
        )
        y = pl.pallas_call(
            _fc_kernel,
            out_shape=jax.ShapeDtypeStruct((B_pad, dq_p), jnp.float32),
            grid=(B_pad // bB,),
            in_specs=[
                pl.BlockSpec((bB, din), lambda i: (i, 0)),        # q, tiled over B
                pl.BlockSpec(w.shape, lambda i: (0, 0)),          # weight, resident
                pl.BlockSpec(b.shape, lambda i: (0, 0)),          # bias, resident
            ],
            out_specs=pl.BlockSpec((bB, dq_p), lambda i: (i, 0)),
            compiler_params=pltpu.CompilerParams(
                dimension_semantics=("parallel",),
                vmem_limit_bytes=vmem_limit),
            cost_estimate=cost,
        )(q_p, w, b)
        return y[:B, :qk_dim], None

    # ---------------- attention branch ----------------
    p = prep["att"]
    B, N, Dq = k.shape
    n_pad = _round_up(N, 8)                 # all of N stays within one block
    n_out = _round_up(n_pad, 128)           # lane-dense attention-weight output

    per8 = (2 * (_tile_bytes((8, Dq), jnp.bfloat16)                 # q in
                 + _tile_bytes((8 * n_pad, Dq), jnp.bfloat16)       # k in (flat)
                 + _tile_bytes((8, dq_p), jnp.float32)              # y out
                 + _tile_bytes((8, n_out), jnp.float32))            # w out
            + 3 * _tile_bytes((8, n_pad, da_p), jnp.float32)        # x / inp / x2
            + _tile_bytes((8, da_p + dq_p), jnp.float32)            # q_both
            + 4 * _tile_bytes((8, n_out), jnp.float32))             # softmax temps
    fixed = 2 * (_tile_bytes(p["wk"].shape, jnp.bfloat16)
                 + _tile_bytes(p["wqcat"].shape, jnp.bfloat16)
                 + _tile_bytes(p["wfus_x"].shape, jnp.bfloat16)
                 + _tile_bytes(p["bk"].shape, jnp.float32)
                 + _tile_bytes(p["bq"].shape, jnp.float32)
                 + _tile_bytes(p["watt"].shape, jnp.float32)
                 + _tile_bytes(p["batt"].shape, jnp.float32)
                 + _tile_bytes(p["bfus"].shape, jnp.float32))
    bB = _pick_block_rows(B, per8, fixed, budget)
    B_pad = _round_up(B, bB)

    q_p = jnp.pad(q, ((0, B_pad - B), (0, 0))).astype(jnp.bfloat16)
    # k flattened to 2-D so the kernel tile is row-dense and needs no packed
    # bf16 3-D reshape; the XLA-level reshape of a contiguous array is free.
    k_p = jnp.pad(k, ((0, B_pad - B), (0, n_pad - N), (0, 0))
                  ).astype(jnp.bfloat16).reshape(B_pad * n_pad, Dq)

    cost = pl.CostEstimate(
        flops=int(2 * B_pad * n_pad * Dq * da_p           # fc_k
                  + 2 * B_pad * Dq * (da_p + dq_p)        # fused q matmul
                  + 2 * B_pad * da_p * dq_p               # x_agg @ wfus_x
                  + 4 * B_pad * n_pad * da_p),            # scores + aggregation
        transcendentals=int(B_pad * n_pad * (da_p + 1)),  # tanh + exp
        bytes_accessed=int(2 * (B_pad * n_pad * Dq + B_pad * Dq)
                           + 4 * (B_pad * dq_p + B_pad * n_out)
                           + 2 * (Dq * da_p + Dq * (da_p + dq_p) + da_p * dq_p)),
    )

    kernel = functools.partial(_att_kernel, n_valid=N)
    y, w = pl.pallas_call(
        kernel,
        out_shape=(jax.ShapeDtypeStruct((B_pad, dq_p), jnp.float32),
                   jax.ShapeDtypeStruct((B_pad, n_out), jnp.float32)),
        grid=(B_pad // bB,),
        in_specs=[
            pl.BlockSpec((bB, Dq), lambda i: (i, 0)),              # q, tiled over B
            pl.BlockSpec((bB * n_pad, Dq), lambda i: (i, 0)),      # k (flat), tiled
            pl.BlockSpec(p["wk"].shape,     lambda i: (0, 0)),     # weights/biases:
            pl.BlockSpec(p["bk"].shape,     lambda i: (0, 0)),     #  constant maps
            pl.BlockSpec(p["wqcat"].shape,  lambda i: (0, 0)),     #  -> VMEM-resident
            pl.BlockSpec(p["bq"].shape,     lambda i: (0, 0)),
            pl.BlockSpec(p["watt"].shape,   lambda i: (0, 0)),
            pl.BlockSpec(p["batt"].shape,   lambda i: (0, 0)),
            pl.BlockSpec(p["wfus_x"].shape, lambda i: (0, 0)),
            pl.BlockSpec(p["bfus"].shape,   lambda i: (0, 0)),
        ],
        out_specs=(pl.BlockSpec((bB, dq_p), lambda i: (i, 0)),
                   pl.BlockSpec((bB, n_out), lambda i: (i, 0))),
        compiler_params=pltpu.CompilerParams(
            dimension_semantics=("parallel",),
            vmem_limit_bytes=vmem_limit),
        cost_estimate=cost,
    )(q_p, k_p, p["wk"], p["bk"], p["wqcat"], p["bq"],
      p["watt"], p["batt"], p["wfus_x"], p["bfus"])

    # PyTorch returns weights as (B, 1, N) (after permute(0, 2, 1))
    return y[:B, :qk_dim], w[:B, :N].reshape(B, 1, N)


# ---------------------------------------------------------------------------
# Pure-JAX f32 reference for verification
# ---------------------------------------------------------------------------
def _ref_forward(params, q, k=None, type="FC"):
    if type == "FC":
        w, b = params["FC_fus"]
        return q @ w + b, None
    wk, bk = params["fc_k"]
    wq, bq = params["fc_q"]
    watt, batt = params["fc_att"]
    wfus, bfus = params["fc_fusion"]
    x = k @ wk + bk                                    # (B, N, Da)
    inputs = (q @ wq + bq)[:, None, :] + x
    s = jnp.tanh(inputs) @ watt + batt                 # (B, N, 1)
    w_ = jax.nn.softmax(s, axis=1).transpose(0, 2, 1)  # (B, 1, N)
    x_agg = jnp.einsum("bon,bnd->bod", w_, x)[:, 0, :]
    y = jnp.concatenate([x_agg, q], axis=-1) @ wfus + bfus
    return y, w_


if __name__ == "__main__":
    qk_dim, att_dim = 32, 32
    B, N = 2, 8

    key = jax.random.PRNGKey(0)
    kp, kq_fc, kq_att, kk = jax.random.split(key, 4)

    params = init_params(kp, qk_dim, att_dim)
    prep = prepare_params(params, qk_dim, att_dim)

    q_fc = jax.random.normal(kq_fc, (B, 2 * qk_dim), jnp.float32)
    q_att = jax.random.normal(kq_att, (B, qk_dim), jnp.float32)
    k_att = jax.random.normal(kk, (B, N, qk_dim), jnp.float32)

    # bf16 MXU operands (f32 accumulation) -> tolerance vs. the f32 reference
    TOL = dict(rtol=3e-2, atol=3e-2)

    # FC branch
    y_fc, w_fc = post_fusion_forward(prep, q_fc, type="FC")
    y_fc = jax.block_until_ready(y_fc)
    y_fc_ref, _ = _ref_forward(params, q_fc, type="FC")
    assert w_fc is None
    assert y_fc.shape == (B, qk_dim)
    assert jnp.allclose(y_fc, y_fc_ref, **TOL)

    # Attention branch
    y_att, w_att = post_fusion_forward(prep, q_att, k_att, type="ATT")
    y_att = jax.block_until_ready(y_att)
    w_att = jax.block_until_ready(w_att)
    y_ref, w_ref = _ref_forward(params, q_att, k_att, type="ATT")
    assert y_att.shape == (B, qk_dim) and w_att.shape == (B, 1, N)
    assert jnp.allclose(y_att, y_ref, **TOL)
    assert jnp.allclose(w_att, w_ref, **TOL)

    print("KERNEL_OK")
</pallas_src>

<mosaic_0001>
module attributes {stable_mosaic.version = 11 : i64} {
  func.func @_fc_kernel(%arg0: i32, %arg1: memref<8x64xbf16, #tpu.memory_space<vmem>>, %arg2: memref<64x128xbf16, #tpu.memory_space<vmem>>, %arg3: memref<1x128xf32, #tpu.memory_space<vmem>>, %arg4: memref<8x128xf32, #tpu.memory_space<vmem>>) attributes {dimension_semantics = [#tpu.dimension_semantics<parallel>], iteration_bounds = array<i64: 1>, scalar_prefetch = 0 : i64, scratch_operands = 0 : i64, tpu.core_type = #tpu.core_type<tc>, window_params = [{transform_indices = @transform_0, window_bounds = array<i64: 8, 64>}, {pipeline_mode = #tpu.pipeline_mode<synchronous>, transform_indices = @transform_1, window_bounds = array<i64: 64, 128>}, {pipeline_mode = #tpu.pipeline_mode<synchronous>, transform_indices = @transform_2, window_bounds = array<i64: 1, 128>}, {transform_indices = @transform_3, window_bounds = array<i64: 8, 128>}]} {
    %c0 = arith.constant 0 : index
    %c0_0 = arith.constant 0 : index
    %0 = vector.load %arg1[%c0, %c0_0] : memref<8x64xbf16, #tpu.memory_space<vmem>>, vector<8x64xbf16>
    %c0_1 = arith.constant 0 : index
    %c0_2 = arith.constant 0 : index
    %1 = vector.load %arg2[%c0_1, %c0_2] : memref<64x128xbf16, #tpu.memory_space<vmem>>, vector<64x128xbf16>
    %cst = arith.constant dense<0.000000e+00> : vector<8x128xf32>
    %2 = tpu.matmul %0, %1, %cst {dimension_numbers = #tpu.dot_dimension_numbers<[1], [0], [0], [1], [0, 0, 1, 1], [], []>} : vector<8x64xbf16>, vector<64x128xbf16>, vector<8x128xf32> -> vector<8x128xf32>
    %c0_3 = arith.constant 0 : index
    %c0_4 = arith.constant 0 : index
    %3 = vector.load %arg3[%c0_3, %c0_4] : memref<1x128xf32, #tpu.memory_space<vmem>>, vector<1x128xf32>
    %4 = vector.broadcast %3 : vector<1x128xf32> to vector<8x128xf32>
    %5 = arith.addf %2, %4 : vector<8x128xf32>
    %c0_5 = arith.constant 0 : index
    %c0_6 = arith.constant 0 : index
    %6 = vector.load %arg4[%c0_5, %c0_6] : memref<8x128xf32, #tpu.memory_space<vmem>>, vector<8x128xf32>
    tpu.vector_store %arg4[%c0_5, %c0_6], %5 {strides = array<i32>} : memref<8x128xf32, #tpu.memory_space<vmem>>, vector<8x128xf32>,
    return
  }
  func.func @transform_0(%arg0: i32) -> (i32, i32) {
    %c0_i32 = arith.constant 0 : i32
    %c0_i32_0 = arith.constant 0 : i32
    return %arg0, %c0_i32 : i32, i32
  }
  func.func @transform_1(%arg0: i32) -> (i32, i32) {
    %c0_i32 = arith.constant 0 : i32
    %c0_i32_0 = arith.constant 0 : i32
    %c0_i32_1 = arith.constant 0 : i32
    return %c0_i32, %c0_i32_0 : i32, i32
  }
  func.func @transform_2(%arg0: i32) -> (i32, i32) {
    %c0_i32 = arith.constant 0 : i32
    %c0_i32_0 = arith.constant 0 : i32
    %c0_i32_1 = arith.constant 0 : i32
    return %c0_i32, %c0_i32_0 : i32, i32
  }
  func.func @transform_3(%arg0: i32) -> (i32, i32) {
    %c0_i32 = arith.constant 0 : i32
    %c0_i32_0 = arith.constant 0 : i32
    return %arg0, %c0_i32 : i32, i32
  }
}

</mosaic_0001>

<llo_original>
// kernel: tpu_custom_call.1
$region0: #{tpu_custom_call.1}
  #allocation0 [shape = 'u32[]', space=smem, size = 0x4, offset = 0x4, fixed_abs, tag = 'smem constant byte address 0x4 - core index']
  #allocation1 [shape = 'u32[72,128]{1,0:T(1,128)}', space=vmem, size = 0x9000, scoped, tag = 'internal scratch']
  %s0 = inlined_call_operand.hbm [shape: bf16[8,64], index: 0, kind: input, shape index: {}]
  %s1 = inlined_call_operand.hbm [shape: bf16[64,128], index: 1, kind: input, shape index: {}]
  %s2 = inlined_call_operand.vmem [shape: f32[1,128], index: 2, kind: input, shape index: {}]
  %s3 = inlined_call_operand.hbm [shape: f32[8,128], index: 3, kind: output, shape index: {}]
  %s4 = sld [smem:[#allocation0]]
  $region30: #{tpu_custom_call.1} parent=0
    _
  %s6 = ssub.s32 1, %s4
  %s7 = scalar_select 0, %s6, %s4
  $region1: #{tpu_custom_call.1} parent=0
    #allocation2 [shape = 'u8[2048]{0}', space=vmem, size = 0x800, scoped, tag = 'input window, operand 0, single buffered']
    #allocation3 [shape = 's32[1]{0}', space=sflag, size = 0x4, scoped, tag = 'scoped memory for tpu_custom_call.1']
    #allocation4 [shape = 's32[1]{0}', space=sflag, size = 0x4, scoped, tag = 'scoped memory for tpu_custom_call.1']
    #allocation5 [shape = 'u8[16384]{0}', space=vmem, size = 0x4000, scoped, tag = 'input window, operand 1, single buffered']
    #allocation6 [shape = 's32[1]{0}', space=sflag, size = 0x4, scoped, tag = 'scoped memory for tpu_custom_call.1']
    #allocation7 [shape = 'u8[4096]{0}', space=vmem, size = 0x1000, scoped, tag = 'output window, operand 0, single buffered']
    %8 = vsyncpa [#allocation3], 0
    %9 = vsyncpa [#allocation6], 0
    %10 = vsyncpa [#allocation4], 0
    // Predicated region
    $region2: #{tpu_custom_call.1} parent=1 // pred_check
      _
    $region3: #{tpu_custom_call.1} parent=1 // pred_check_branch
      %12 = sbr.rel (0) target = $region5
    $region4: #{tpu_custom_call.1} parent=1 // pred_region
      %14 = vsyncadd [#allocation3], 0
      %s16 = sshll.u32 %s0, 4
      %s17 = int_to_ptr.hbm [resolvable:$true] %s16
      %s18 = sshll.u32 [#allocation2], 4
      %s19 = int_to_ptr.vmem [resolvable:$true] %s18
      %21 = dma.hbm_to_vmem [thread:$0]  %s17, 64, %s19, [#allocation3]
    $region5: #{tpu_custom_call.1} parent=1 // pred_fallthru
      _
    // Predicated region
    $region6: #{tpu_custom_call.1} parent=1 // pred_check
      _
    $region7: #{tpu_custom_call.1} parent=1 // pred_check_branch
      %23 = sbr.rel (0) target = $region9
    $region8: #{tpu_custom_call.1} parent=1 // pred_region
      %25 = vsyncadd [#allocation6], 0
      %s26 = sshll.u32 %s1, 4
      %s27 = int_to_ptr.hbm [resolvable:$true] %s26
      %s28 = sshll.u32 [#allocation5], 4
      %s29 = int_to_ptr.vmem [resolvable:$true] %s28
      %34 = dma.hbm_to_vmem [thread:$0]  %s27, 512, %s29, [#allocation6], 64, 64, 4
    $region9: #{tpu_custom_call.1} parent=1 // pred_fallthru
      _
    // Predicated region
    $region10: #{tpu_custom_call.1} parent=1 // pred_check
      _
    $region11: #{tpu_custom_call.1} parent=1 // pred_check_branch
      %36 = sbr.rel (0) target = $region13
    $region12: #{tpu_custom_call.1} parent=1 // pred_region
      _
    $region13: #{tpu_custom_call.1} parent=1 // pred_fallthru
      _
    // Predicated region
    $region14: #{tpu_custom_call.1} parent=1 // pred_check
      _
    $region15: #{tpu_custom_call.1} parent=1 // pred_check_branch
      %38 = sbr.rel (0) target = $region17
    $region16: #{tpu_custom_call.1} parent=1 // pred_region
      %40 = dma.done [#allocation3], 64
    $region17: #{tpu_custom_call.1} parent=1 // pred_fallthru
      _
    // Predicated region
    $region18: #{tpu_custom_call.1} parent=1 // pred_check
      _
    $region19: #{tpu_custom_call.1} parent=1 // pred_check_branch
      %42 = sbr.rel (0) target = $region21
    $region20: #{tpu_custom_call.1} parent=1 // pred_region
      %44 = dma.done [#allocation6], 512
    $region21: #{tpu_custom_call.1} parent=1 // pred_fallthru
      _
    %v46 = vld [vmem:[#allocation2] sm:$0xf]
    %v47 = vld [vmem:[#allocation5] sm:$0xf]
    %v48 = vld [vmem:[#allocation5 + $0x4] sm:$0xf]
    %v49 = vld [vmem:[#allocation5 + $0x8] sm:$0xf]
    %v50 = vld [vmem:[#allocation5 + $0xc] sm:$0xf]
    %v51 = vld [vmem:[#allocation5 + $0x10] sm:$0xf]
    %v52 = vld [vmem:[#allocation5 + $0x14] sm:$0xf]
    %v53 = vld [vmem:[#allocation5 + $0x18] sm:$0xf]
    %v54 = vld [vmem:[#allocation5 + $0x1c] sm:$0xf]
    %v55 = vld [vmem:[%s2] sm:$0x1]
    %v57 = vperm.slane %v55, 0
    %v67 = vunpack.c.l.b16 %v47
    %v68 = vunpack.c.l.b16 %v48
    %v69 = vunpack.c.l.b16 %v49
    %v70 = vunpack.c.l.b16 %v50
    %v71 = vunpack.c.l.b16 %v51
    %v72 = vunpack.c.l.b16 %v52
    %v73 = vunpack.c.l.b16 %v53
    %v74 = vunpack.c.l.b16 %v54
    %v75 = vpack.c.b16 %v68, %v67
    %v76 = vpack.c.b16 %v70, %v69
    %v77 = vpack.c.b16 %v72, %v71
    %v78 = vpack.c.b16 %v74, %v73
    %vm83 = vcmask 523264
    %v85 = vsel %vm83, %v46, 0
    %87 = vmatpush.bf16.msra.mxu0 0
    %88 = vmatpush.bf16.msra.mxu0 0
    %89 = vmatpush.bf16.msra.mxu0 0
    %90 = vmatpush.bf16.msra.mxu0 0
    %91 = vmatpush.bf16.msra.mxu0 %v78
    %92 = vmatpush.bf16.msra.mxu0 %v77
    %93 = vmatpush.bf16.msra.mxu0 %v76
    %94 = vmatpush.bf16.msra.mxu0 %v75
    %95 = vmatmul.bf16.gmra.mxu0 %v85
    %v96 = vpop.f32.mrf.mxu0
    %v97 = vadd.f32 %v57, %v96
    %v98 = vpop.f32.mrf.mxu0
    %99 = vdwg.mxu0
    %100 = vst [vmem:[#allocation7] sm:$0xff] %v97
    // Predicated region
    $region22: #{tpu_custom_call.1} parent=1 // pred_check
      _
    $region23: #{tpu_custom_call.1} parent=1 // pred_check_branch
      %102 = sbr.rel (0) target = $region25
    $region24: #{tpu_custom_call.1} parent=1 // pred_region
      %104 = vsyncadd [#allocation4], 0
      %s106 = sshll.u32 [#allocation7], 4
      %s107 = int_to_ptr.vmem [resolvable:$true] %s106
      %s108 = sshll.u32 %s3, 4
      %s109 = int_to_ptr.hbm [resolvable:$true] %s108
      %111 = dma.vmem_to_hbm [thread:$0]  %s107, 128, %s109, [#allocation4]
    $region25: #{tpu_custom_call.1} parent=1 // pred_fallthru
      _
    // Predicated region
    $region26: #{tpu_custom_call.1} parent=1 // pred_check
      _
    $region27: #{tpu_custom_call.1} parent=1 // pred_check_branch
      %113 = sbr.rel (0) target = $region29
    $region28: #{tpu_custom_call.1} parent=1 // pred_region
      %115 = dma.done [#allocation4], 128
    $region29: #{tpu_custom_call.1} parent=1 // pred_fallthru
      _
    %116 = vsyncpa [#allocation3], 1
    %117 = vsyncpa [#allocation6], 1
    %118 = vsyncpa [#allocation4], 1

</llo_original>
